<compile_context>
chip_gen: v5e
topology: v5e:2x2
jax: 0.10.0
libtpu: 0.0.40
codegen_flags: <defaults>
</compile_context>

<pallas_src>
import functools

import jax
import jax.numpy as jnp
from jax.experimental import pallas as pl
from jax.experimental.pallas import tpu as pltpu


_MXU_MIN_CHANNELS = 32        # TODO(synk): sweep per chip (v5e 128-wide MXU vs
                              # v6e/v7x 256-wide) and per dtype.
_TILE_BYTE_BUDGET = 4 << 20   # bytes for the double-buffered in+out blocks
_MAX_T_TILE = 32768           # lane-axis time-tile ceiling
_MIN_T_TILE = 256             # lane-axis time-tile floor (multiple of 128)


def _largest_divisor_leq(n, m):
    for g in range(min(n, m), 0, -1):
        if n % g == 0:
            return g
    return 1


def _causal_conv1d_kernel(x_ref, w_ref, b_ref, o_ref, halo_ref, *,
                          kernel_size, dilation, c_in, c_out, groups, use_mxu):
    """One (batch-group, time-tile) step of a causal dilated conv (NCT layout).

    x_ref   : (G*C_in,  T_tile)    current time tile (time on the lane axis)
    w_ref   : (K, C_out, C_in)     weights
    b_ref   : (C_out, 1)           bias
    o_ref   : (G*C_out, T_tile)    output tile
    halo_ref: (G*C_in,  P)  VMEM   last P = (K-1)*dilation samples of the
                                   previous time tile of the same batch group
    """
    K, d, G = kernel_size, dilation, groups
    P = (K - 1) * d
    T_tile = x_ref.shape[-1]

    x_cur = x_ref[...]

    if P > 0:
        # Causal left padding: zero the halo at the first time tile of each
        # batch group (grid iteration is batch-major, time-minor).
        @pl.when(pl.program_id(1) == 0)
        def _():
            halo_ref[...] = jnp.zeros_like(halo_ref)

        x_ext = jnp.concatenate([halo_ref[...], x_cur], axis=-1)  # (G*C_in, P+T)
    else:
        x_ext = x_cur

    w = w_ref[...]                              # (K, C_out, C_in)
    b = b_ref[...].astype(jnp.float32)          # (C_out, 1)

    if use_mxu:
        # Wide channels (G == 1): K accumulating MXU dots, no concat temp.
        # TODO(synk): optionally cast operands to bf16 on v6e/v7x when the
        # accuracy budget allows (MXU is bf16-native; keep f32 accumulation).
        assert G == 1
        acc = jnp.zeros((c_out, T_tile), jnp.float32)
        for k in range(K):
            xk = x_ext[:, k * d:k * d + T_tile]                  # (C_in, T)
            acc = acc + jnp.dot(w[k].astype(xk.dtype), xk,
                                preferred_element_type=jnp.float32)
        o_ref[...] = (acc + b).astype(o_ref.dtype)
    else:
        # Tiny channels: G*K*C_in broadcasted FMAs on the VPU over the
        # lane-dense time axis (the MXU would be >90% idle here).
        w32 = w.astype(jnp.float32)
        outs = []
        for g in range(G):
            acc = jnp.zeros((c_out, T_tile), jnp.float32)
            for k in range(K):
                xk = x_ext[g * c_in:(g + 1) * c_in,
                           k * d:k * d + T_tile].astype(jnp.float32)
                for ci in range(c_in):
                    acc = acc + w32[k, :, ci:ci + 1] * xk[ci:ci + 1, :]
            outs.append(acc + b)
        out = outs[0] if G == 1 else jnp.concatenate(outs, axis=0)
        o_ref[...] = out.astype(o_ref.dtype)     # single lane-dense full store

    if P > 0:
        # Carry the most recent P samples into the halo for the next tile of
        # the same batch group; skipped on the last tile (avoids a dead store
        # and keeps ragged-final-tile garbage out of the halo).
        @pl.when(pl.program_id(1) + 1 < pl.num_programs(1))
        def _():
            halo_ref[...] = x_ext[:, T_tile:T_tile + P]


def causal_conv1d(x_nct, weight, bias, *, dilation=1, max_time_tile=None):
    """Causal dilated Conv1d matching the PyTorch CausalConv1d module.

    Args:
      x_nct : (B, C_in, T)      input, PyTorch NCT layout
      weight: (C_out, C_in, K)  PyTorch Conv1d weight layout
      bias  : (C_out,)
      max_time_tile: optional cap on the time tile (testing / tuning knob)
    Returns:
      (B, C_out, T) array with x_nct.dtype
    """
    B, C_in, T = x_nct.shape
    C_out, _, K = weight.shape
    P = (K - 1) * dilation
    dtype = x_nct.dtype
    itemsize = jnp.dtype(dtype).itemsize

    use_mxu = min(C_in, C_out) >= _MXU_MIN_CHANNELS

    # Batch packing: fold G batch elements into the sublane axis when C_in is
    # below the sublane pack (8 rows/vreg for f32, 16 for bf16).  Free,
    # contiguous reshape; restores dense vregs and divides grid steps by G.
    pack = max(1, 32 // itemsize)
    if use_mxu or C_in >= pack:
        G = 1
    else:
        G = _largest_divisor_leq(B, max(1, pack // C_in))
    rows_in, rows_out = G * C_in, G * C_out
    n_bgroups = B // G

    # Adaptive time tile: as big as the VMEM budget allows (dominant win for
    # tiny-channel configs, which are grid-step-overhead bound), 128-aligned,
    # and balanced across tiles so the ragged overhang is < 128*num_t lanes.
    per_lane = 2 * (rows_in + rows_out) * itemsize        # double-buffered blocks
    t_max = max(_MIN_T_TILE, min(_MAX_T_TILE, _TILE_BYTE_BUDGET // per_lane))
    if max_time_tile is not None:
        t_max = min(t_max, int(max_time_tile))
    t_max = max(128, (t_max // 128) * 128)

    if T <= t_max:
        t_tile, num_t = T, 1                 # single full-extent tile, no pad
    else:
        nt = pl.cdiv(T, t_max)
        t_tile = 128 * pl.cdiv(T, 128 * nt)  # 128-aligned, balanced
        num_t = pl.cdiv(T, t_tile)           # final tile may be ragged

    x_in = x_nct.reshape(n_bgroups, rows_in, T)            # free reshape
    w_kio = jnp.transpose(weight, (2, 0, 1))               # (K, C_out, C_in)
    b2 = bias.reshape(C_out, 1)

    kernel = functools.partial(
        _causal_conv1d_kernel, kernel_size=K, dilation=dilation,
        c_in=C_in, c_out=C_out, groups=G, use_mxu=use_mxu)

    out = pl.pallas_call(
        kernel,
        out_shape=jax.ShapeDtypeStruct((n_bgroups, rows_out, T), dtype),
        grid_spec=pltpu.PrefetchScalarGridSpec(
            num_scalar_prefetch=0,
            grid=(n_bgroups, num_t),
            in_specs=[
                pl.BlockSpec((None, rows_in, t_tile), lambda b, t: (b, 0, t)),
                pl.BlockSpec((K, C_out, C_in), lambda b, t: (0, 0, 0)),
                pl.BlockSpec((C_out, 1), lambda b, t: (0, 0)),
            ],
            out_specs=pl.BlockSpec((None, rows_out, t_tile),
                                   lambda b, t: (b, 0, t)),
            scratch_shapes=[pltpu.VMEM((rows_in, max(P, 1)), dtype)],
        ),
        compiler_params=pltpu.CompilerParams(
            dimension_semantics=("parallel", "arbitrary"),
            vmem_limit_bytes=32 * 1024 * 1024),
    )(x_in, w_kio, b2)

    return out.reshape(B, C_out, T)                        # free reshape


def _reference_causal_conv1d(x_nct, weight, bias, *, dilation=1):
    """Plain-JAX reference (mirrors the PyTorch module exactly)."""
    K = weight.shape[2]
    P = (K - 1) * dilation
    T = x_nct.shape[2]
    x_padded = jnp.pad(x_nct, ((0, 0), (0, 0), (P, P)))    # ConstantPad1d(P)
    y = jax.lax.conv_general_dilated(
        x_padded, weight,
        window_strides=(1,), padding="VALID", rhs_dilation=(dilation,),
        dimension_numbers=("NCH", "OIH", "NCH"))
    return (y + bias[None, :, None])[:, :, :T]             # [:, :, :x.size(2)]


if __name__ == "__main__":
    # Typical module config (tiny channels -> VPU path, batch-packed).
    in_channels, out_channels, kernel_size, dilation = 4, 8, 3, 2

    key = jax.random.PRNGKey(0)
    kw, kb, k1, k2, k3, k4, kw2, kb2, k5 = jax.random.split(key, 9)
    weight = jax.random.normal(
        kw, (out_channels, in_channels, kernel_size), jnp.float32) * 0.1
    bias = jax.random.normal(kb, (out_channels,), jnp.float32) * 0.1

    # 1) Small single-tile case, batch packed (B=2 -> G=2).
    x1 = jax.random.normal(k1, (2, in_channels, 16), jnp.float32)
    y1 = jax.block_until_ready(causal_conv1d(x1, weight, bias, dilation=dilation))
    r1 = _reference_causal_conv1d(x1, weight, bias, dilation=dilation)
    assert y1.shape == (2, out_channels, 16)
    assert jnp.allclose(y1, r1, atol=1e-5, rtol=1e-5)

    # 2) Longer sequence: still one tile under the larger adaptive budget.
    x2 = jax.random.normal(k2, (2, in_channels, 1500), jnp.float32)
    y2 = jax.block_until_ready(causal_conv1d(x2, weight, bias, dilation=dilation))
    r2 = _reference_causal_conv1d(x2, weight, bias, dilation=dilation)
    assert jnp.allclose(y2, r2, atol=1e-4, rtol=1e-4)

    # 3) Multi-tile time axis with halo carry and a ragged final block
    #    (forced small tile), odd batch -> no packing (G=1).
    x3 = jax.random.normal(k3, (3, in_channels, 1500), jnp.float32)
    y3 = jax.block_until_ready(
        causal_conv1d(x3, weight, bias, dilation=dilation, max_time_tile=512))
    r3 = _reference_causal_conv1d(x3, weight, bias, dilation=dilation)
    assert jnp.allclose(y3, r3, atol=1e-4, rtol=1e-4)

    # 4) Multi-tile + batch packing together (divisible T).
    x4 = jax.random.normal(k4, (2, in_channels, 1536), jnp.float32)
    y4 = jax.block_until_ready(
        causal_conv1d(x4, weight, bias, dilation=dilation, max_time_tile=512))
    r4 = _reference_causal_conv1d(x4, weight, bias, dilation=dilation)
    assert jnp.allclose(y4, r4, atol=1e-4, rtol=1e-4)

    # 5) Wide-channel config exercising the MXU path (K accumulating dots).
    c_wide = 64
    weight2 = jax.random.normal(kw2, (c_wide, c_wide, kernel_size), jnp.float32) * 0.05
    bias2 = jax.random.normal(kb2, (c_wide,), jnp.float32) * 0.05
    x5 = jax.random.normal(k5, (1, c_wide, 300), jnp.float32)
    y5 = jax.block_until_ready(causal_conv1d(x5, weight2, bias2, dilation=1))
    r5 = _reference_causal_conv1d(x5, weight2, bias2, dilation=1)
    assert jnp.allclose(y5, r5, atol=1e-4, rtol=1e-4)

    print("KERNEL_OK")
</pallas_src>

<mosaic_0001>
module attributes {stable_mosaic.version = 11 : i64} {
  func.func @_causal_conv1d_kernel(%arg0: i32, %arg1: i32, %arg2: memref<1x8x16xf32, #tpu.memory_space<vmem>>, %arg3: memref<3x8x4xf32, #tpu.memory_space<vmem>>, %arg4: memref<8x1xf32, #tpu.memory_space<vmem>>, %arg5: memref<1x16x16xf32, #tpu.memory_space<vmem>>, %arg6: memref<8x4xf32, #tpu.memory_space<vmem>>) attributes {dimension_semantics = [#tpu.dimension_semantics<parallel>, #tpu.dimension_semantics<arbitrary>], iteration_bounds = array<i64: 1, 1>, scalar_prefetch = 0 : i64, scratch_operands = 1 : i64, tpu.core_type = #tpu.core_type<tc>, window_params = [{transform_indices = @transform_0, window_bounds = array<i64: 1, 8, 16>}, {pipeline_mode = #tpu.pipeline_mode<synchronous>, transform_indices = @transform_1, window_bounds = array<i64: 3, 8, 4>}, {pipeline_mode = #tpu.pipeline_mode<synchronous>, transform_indices = @transform_2, window_bounds = array<i64: 8, 1>}, {transform_indices = @transform_3, window_bounds = array<i64: 1, 16, 16>}]} {
    %c0 = arith.constant 0 : index
    %c0_0 = arith.constant 0 : index
    %c0_1 = arith.constant 0 : index
    %0 = vector.load %arg2[%c0, %c0_0, %c0_1] : memref<1x8x16xf32, #tpu.memory_space<vmem>>, vector<1x8x16xf32>
    %1 = vector.shape_cast %0 : vector<1x8x16xf32> to vector<8x16xf32>
    %c0_i32 = arith.constant 0 : i32
    %2 = arith.cmpi eq, %arg1, %c0_i32 : i32
    %3 = arith.extui %2 : i1 to i32
    %c0_i32_2 = arith.constant 0 : i32
    %4 = arith.cmpi ne, %3, %c0_i32_2 : i32
    scf.if %4 {
      %cst_16 = arith.constant 0.000000e+00 : f32
      %197 = vector.broadcast %cst_16 : f32 to vector<8x4xf32>
      %c0_17 = arith.constant 0 : index
      %c0_18 = arith.constant 0 : index
      %198 = vector.load %arg6[%c0_17, %c0_18] : memref<8x4xf32, #tpu.memory_space<vmem>>, vector<8x4xf32>
      tpu.vector_store %arg6[%c0_17, %c0_18], %197 {strides = array<i32>} : memref<8x4xf32, #tpu.memory_space<vmem>>, vector<8x4xf32>,
    } else {
    }
    %c0_3 = arith.constant 0 : index
    %c0_4 = arith.constant 0 : index
    %5 = vector.load %arg6[%c0_3, %c0_4] : memref<8x4xf32, #tpu.memory_space<vmem>>, vector<8x4xf32>
    %6 = tpu.concatenate %5, %1 in 1 : vector<8x4xf32>, vector<8x16xf32> -> vector<8x20xf32>
    %c0_5 = arith.constant 0 : index
    %c0_6 = arith.constant 0 : index
    %c0_7 = arith.constant 0 : index
    %7 = vector.load %arg3[%c0_5, %c0_6, %c0_7] : memref<3x8x4xf32, #tpu.memory_space<vmem>>, vector<3x8x4xf32>
    %c0_8 = arith.constant 0 : index
    %c0_9 = arith.constant 0 : index
    %8 = vector.load %arg4[%c0_8, %c0_9] : memref<8x1xf32, #tpu.memory_space<vmem>>, vector<8x1xf32>
    %cst = arith.constant 0.000000e+00 : f32
    %9 = vector.broadcast %cst : f32 to vector<8x16xf32>
    %10 = vector.extract_strided_slice %6 {offsets = [0, 0], sizes = [4, 16], strides = [1, 1]} : vector<8x20xf32> to vector<4x16xf32>
    %11 = vector.extract_strided_slice %7 {offsets = [0, 0, 0], sizes = [1, 8, 1], strides = [1, 1, 1]} : vector<3x8x4xf32> to vector<1x8x1xf32>
    %12 = vector.shape_cast %11 : vector<1x8x1xf32> to vector<8x1xf32>
    %13 = vector.extract_strided_slice %10 {offsets = [0, 0], sizes = [1, 16], strides = [1, 1]} : vector<4x16xf32> to vector<1x16xf32>
    %14 = vector.broadcast %12 : vector<8x1xf32> to vector<8x16xf32>
    %15 = vector.broadcast %13 : vector<1x16xf32> to vector<8x16xf32>
    %16 = arith.mulf %14, %15 : vector<8x16xf32>
    %17 = arith.addf %9, %16 : vector<8x16xf32>
    %18 = vector.extract_strided_slice %7 {offsets = [0, 0, 1], sizes = [1, 8, 1], strides = [1, 1, 1]} : vector<3x8x4xf32> to vector<1x8x1xf32>
    %19 = vector.shape_cast %18 : vector<1x8x1xf32> to vector<8x1xf32>
    %20 = vector.extract_strided_slice %10 {offsets = [1, 0], sizes = [1, 16], strides = [1, 1]} : vector<4x16xf32> to vector<1x16xf32>
    %21 = vector.broadcast %19 : vector<8x1xf32> to vector<8x16xf32>
    %22 = vector.broadcast %20 : vector<1x16xf32> to vector<8x16xf32>
    %23 = arith.mulf %21, %22 : vector<8x16xf32>
    %24 = arith.addf %17, %23 : vector<8x16xf32>
    %25 = vector.extract_strided_slice %7 {offsets = [0, 0, 2], sizes = [1, 8, 1], strides = [1, 1, 1]} : vector<3x8x4xf32> to vector<1x8x1xf32>
    %26 = vector.shape_cast %25 : vector<1x8x1xf32> to vector<8x1xf32>
    %27 = vector.extract_strided_slice %10 {offsets = [2, 0], sizes = [1, 16], strides = [1, 1]} : vector<4x16xf32> to vector<1x16xf32>
    %28 = vector.broadcast %26 : vector<8x1xf32> to vector<8x16xf32>
    %29 = vector.broadcast %27 : vector<1x16xf32> to vector<8x16xf32>
    %30 = arith.mulf %28, %29 : vector<8x16xf32>
    %31 = arith.addf %24, %30 : vector<8x16xf32>
    %32 = vector.extract_strided_slice %7 {offsets = [0, 0, 3], sizes = [1, 8, 1], strides = [1, 1, 1]} : vector<3x8x4xf32> to vector<1x8x1xf32>
    %33 = vector.shape_cast %32 : vector<1x8x1xf32> to vector<8x1xf32>
    %34 = vector.extract_strided_slice %10 {offsets = [3, 0], sizes = [1, 16], strides = [1, 1]} : vector<4x16xf32> to vector<1x16xf32>
    %35 = vector.broadcast %33 : vector<8x1xf32> to vector<8x16xf32>
    %36 = vector.broadcast %34 : vector<1x16xf32> to vector<8x16xf32>
    %37 = arith.mulf %35, %36 : vector<8x16xf32>
    %38 = arith.addf %31, %37 : vector<8x16xf32>
    %39 = vector.extract_strided_slice %6 {offsets = [0, 2], sizes = [4, 16], strides = [1, 1]} : vector<8x20xf32> to vector<4x16xf32>
    %40 = vector.extract_strided_slice %7 {offsets = [1, 0, 0], sizes = [1, 8, 1], strides = [1, 1, 1]} : vector<3x8x4xf32> to vector<1x8x1xf32>
    %41 = vector.shape_cast %40 : vector<1x8x1xf32> to vector<8x1xf32>
    %42 = vector.extract_strided_slice %39 {offsets = [0, 0], sizes = [1, 16], strides = [1, 1]} : vector<4x16xf32> to vector<1x16xf32>
    %43 = vector.broadcast %41 : vector<8x1xf32> to vector<8x16xf32>
    %44 = vector.broadcast %42 : vector<1x16xf32> to vector<8x16xf32>
    %45 = arith.mulf %43, %44 : vector<8x16xf32>
    %46 = arith.addf %38, %45 : vector<8x16xf32>
    %47 = vector.extract_strided_slice %7 {offsets = [1, 0, 1], sizes = [1, 8, 1], strides = [1, 1, 1]} : vector<3x8x4xf32> to vector<1x8x1xf32>
    %48 = vector.shape_cast %47 : vector<1x8x1xf32> to vector<8x1xf32>
    %49 = vector.extract_strided_slice %39 {offsets = [1, 0], sizes = [1, 16], strides = [1, 1]} : vector<4x16xf32> to vector<1x16xf32>
    %50 = vector.broadcast %48 : vector<8x1xf32> to vector<8x16xf32>
    %51 = vector.broadcast %49 : vector<1x16xf32> to vector<8x16xf32>
    %52 = arith.mulf %50, %51 : vector<8x16xf32>
    %53 = arith.addf %46, %52 : vector<8x16xf32>
    %54 = vector.extract_strided_slice %7 {offsets = [1, 0, 2], sizes = [1, 8, 1], strides = [1, 1, 1]} : vector<3x8x4xf32> to vector<1x8x1xf32>
    %55 = vector.shape_cast %54 : vector<1x8x1xf32> to vector<8x1xf32>
    %56 = vector.extract_strided_slice %39 {offsets = [2, 0], sizes = [1, 16], strides = [1, 1]} : vector<4x16xf32> to vector<1x16xf32>
    %57 = vector.broadcast %55 : vector<8x1xf32> to vector<8x16xf32>
    %58 = vector.broadcast %56 : vector<1x16xf32> to vector<8x16xf32>
    %59 = arith.mulf %57, %58 : vector<8x16xf32>
    %60 = arith.addf %53, %59 : vector<8x16xf32>
    %61 = vector.extract_strided_slice %7 {offsets = [1, 0, 3], sizes = [1, 8, 1], strides = [1, 1, 1]} : vector<3x8x4xf32> to vector<1x8x1xf32>
    %62 = vector.shape_cast %61 : vector<1x8x1xf32> to vector<8x1xf32>
    %63 = vector.extract_strided_slice %39 {offsets = [3, 0], sizes = [1, 16], strides = [1, 1]} : vector<4x16xf32> to vector<1x16xf32>
    %64 = vector.broadcast %62 : vector<8x1xf32> to vector<8x16xf32>
    %65 = vector.broadcast %63 : vector<1x16xf32> to vector<8x16xf32>
    %66 = arith.mulf %64, %65 : vector<8x16xf32>
    %67 = arith.addf %60, %66 : vector<8x16xf32>
    %68 = vector.extract_strided_slice %6 {offsets = [0, 4], sizes = [4, 16], strides = [1, 1]} : vector<8x20xf32> to vector<4x16xf32>
    %69 = vector.extract_strided_slice %7 {offsets = [2, 0, 0], sizes = [1, 8, 1], strides = [1, 1, 1]} : vector<3x8x4xf32> to vector<1x8x1xf32>
    %70 = vector.shape_cast %69 : vector<1x8x1xf32> to vector<8x1xf32>
    %71 = vector.extract_strided_slice %68 {offsets = [0, 0], sizes = [1, 16], strides = [1, 1]} : vector<4x16xf32> to vector<1x16xf32>
    %72 = vector.broadcast %70 : vector<8x1xf32> to vector<8x16xf32>
    %73 = vector.broadcast %71 : vector<1x16xf32> to vector<8x16xf32>
    %74 = arith.mulf %72, %73 : vector<8x16xf32>
    %75 = arith.addf %67, %74 : vector<8x16xf32>
    %76 = vector.extract_strided_slice %7 {offsets = [2, 0, 1], sizes = [1, 8, 1], strides = [1, 1, 1]} : vector<3x8x4xf32> to vector<1x8x1xf32>
    %77 = vector.shape_cast %76 : vector<1x8x1xf32> to vector<8x1xf32>
    %78 = vector.extract_strided_slice %68 {offsets = [1, 0], sizes = [1, 16], strides = [1, 1]} : vector<4x16xf32> to vector<1x16xf32>
    %79 = vector.broadcast %77 : vector<8x1xf32> to vector<8x16xf32>
    %80 = vector.broadcast %78 : vector<1x16xf32> to vector<8x16xf32>
    %81 = arith.mulf %79, %80 : vector<8x16xf32>
    %82 = arith.addf %75, %81 : vector<8x16xf32>
    %83 = vector.extract_strided_slice %7 {offsets = [2, 0, 2], sizes = [1, 8, 1], strides = [1, 1, 1]} : vector<3x8x4xf32> to vector<1x8x1xf32>
    %84 = vector.shape_cast %83 : vector<1x8x1xf32> to vector<8x1xf32>
    %85 = vector.extract_strided_slice %68 {offsets = [2, 0], sizes = [1, 16], strides = [1, 1]} : vector<4x16xf32> to vector<1x16xf32>
    %86 = vector.broadcast %84 : vector<8x1xf32> to vector<8x16xf32>
    %87 = vector.broadcast %85 : vector<1x16xf32> to vector<8x16xf32>
    %88 = arith.mulf %86, %87 : vector<8x16xf32>
    %89 = arith.addf %82, %88 : vector<8x16xf32>
    %90 = vector.extract_strided_slice %7 {offsets = [2, 0, 3], sizes = [1, 8, 1], strides = [1, 1, 1]} : vector<3x8x4xf32> to vector<1x8x1xf32>
    %91 = vector.shape_cast %90 : vector<1x8x1xf32> to vector<8x1xf32>
    %92 = vector.extract_strided_slice %68 {offsets = [3, 0], sizes = [1, 16], strides = [1, 1]} : vector<4x16xf32> to vector<1x16xf32>
    %93 = vector.broadcast %91 : vector<8x1xf32> to vector<8x16xf32>
    %94 = vector.broadcast %92 : vector<1x16xf32> to vector<8x16xf32>
    %95 = arith.mulf %93, %94 : vector<8x16xf32>
    %96 = arith.addf %89, %95 : vector<8x16xf32>
    %97 = vector.broadcast %8 : vector<8x1xf32> to vector<8x16xf32>
    %98 = arith.addf %96, %97 : vector<8x16xf32>
    %cst_10 = arith.constant 0.000000e+00 : f32
    %99 = vector.broadcast %cst_10 : f32 to vector<8x16xf32>
    %100 = vector.extract_strided_slice %6 {offsets = [4, 0], sizes = [4, 16], strides = [1, 1]} : vector<8x20xf32> to vector<4x16xf32>
    %101 = vector.extract_strided_slice %7 {offsets = [0, 0, 0], sizes = [1, 8, 1], strides = [1, 1, 1]} : vector<3x8x4xf32> to vector<1x8x1xf32>
    %102 = vector.shape_cast %101 : vector<1x8x1xf32> to vector<8x1xf32>
    %103 = vector.extract_strided_slice %100 {offsets = [0, 0], sizes = [1, 16], strides = [1, 1]} : vector<4x16xf32> to vector<1x16xf32>
    %104 = vector.broadcast %102 : vector<8x1xf32> to vector<8x16xf32>
    %105 = vector.broadcast %103 : vector<1x16xf32> to vector<8x16xf32>
    %106 = arith.mulf %104, %105 : vector<8x16xf32>
    %107 = arith.addf %99, %106 : vector<8x16xf32>
    %108 = vector.extract_strided_slice %7 {offsets = [0, 0, 1], sizes = [1, 8, 1], strides = [1, 1, 1]} : vector<3x8x4xf32> to vector<1x8x1xf32>
    %109 = vector.shape_cast %108 : vector<1x8x1xf32> to vector<8x1xf32>
    %110 = vector.extract_strided_slice %100 {offsets = [1, 0], sizes = [1, 16], strides = [1, 1]} : vector<4x16xf32> to vector<1x16xf32>
    %111 = vector.broadcast %109 : vector<8x1xf32> to vector<8x16xf32>
    %112 = vector.broadcast %110 : vector<1x16xf32> to vector<8x16xf32>
    %113 = arith.mulf %111, %112 : vector<8x16xf32>
    %114 = arith.addf %107, %113 : vector<8x16xf32>
    %115 = vector.extract_strided_slice %7 {offsets = [0, 0, 2], sizes = [1, 8, 1], strides = [1, 1, 1]} : vector<3x8x4xf32> to vector<1x8x1xf32>
    %116 = vector.shape_cast %115 : vector<1x8x1xf32> to vector<8x1xf32>
    %117 = vector.extract_strided_slice %100 {offsets = [2, 0], sizes = [1, 16], strides = [1, 1]} : vector<4x16xf32> to vector<1x16xf32>
    %118 = vector.broadcast %116 : vector<8x1xf32> to vector<8x16xf32>
    %119 = vector.broadcast %117 : vector<1x16xf32> to vector<8x16xf32>
    %120 = arith.mulf %118, %119 : vector<8x16xf32>
    %121 = arith.addf %114, %120 : vector<8x16xf32>
    %122 = vector.extract_strided_slice %7 {offsets = [0, 0, 3], sizes = [1, 8, 1], strides = [1, 1, 1]} : vector<3x8x4xf32> to vector<1x8x1xf32>
    %123 = vector.shape_cast %122 : vector<1x8x1xf32> to vector<8x1xf32>
    %124 = vector.extract_strided_slice %100 {offsets = [3, 0], sizes = [1, 16], strides = [1, 1]} : vector<4x16xf32> to vector<1x16xf32>
    %125 = vector.broadcast %123 : vector<8x1xf32> to vector<8x16xf32>
    %126 = vector.broadcast %124 : vector<1x16xf32> to vector<8x16xf32>
    %127 = arith.mulf %125, %126 : vector<8x16xf32>
    %128 = arith.addf %121, %127 : vector<8x16xf32>
    %129 = vector.extract_strided_slice %6 {offsets = [4, 2], sizes = [4, 16], strides = [1, 1]} : vector<8x20xf32> to vector<4x16xf32>
    %130 = vector.extract_strided_slice %7 {offsets = [1, 0, 0], sizes = [1, 8, 1], strides = [1, 1, 1]} : vector<3x8x4xf32> to vector<1x8x1xf32>
    %131 = vector.shape_cast %130 : vector<1x8x1xf32> to vector<8x1xf32>
    %132 = vector.extract_strided_slice %129 {offsets = [0, 0], sizes = [1, 16], strides = [1, 1]} : vector<4x16xf32> to vector<1x16xf32>
    %133 = vector.broadcast %131 : vector<8x1xf32> to vector<8x16xf32>
    %134 = vector.broadcast %132 : vector<1x16xf32> to vector<8x16xf32>
    %135 = arith.mulf %133, %134 : vector<8x16xf32>
    %136 = arith.addf %128, %135 : vector<8x16xf32>
    %137 = vector.extract_strided_slice %7 {offsets = [1, 0, 1], sizes = [1, 8, 1], strides = [1, 1, 1]} : vector<3x8x4xf32> to vector<1x8x1xf32>
    %138 = vector.shape_cast %137 : vector<1x8x1xf32> to vector<8x1xf32>
    %139 = vector.extract_strided_slice %129 {offsets = [1, 0], sizes = [1, 16], strides = [1, 1]} : vector<4x16xf32> to vector<1x16xf32>
    %140 = vector.broadcast %138 : vector<8x1xf32> to vector<8x16xf32>
    %141 = vector.broadcast %139 : vector<1x16xf32> to vector<8x16xf32>
    %142 = arith.mulf %140, %141 : vector<8x16xf32>
    %143 = arith.addf %136, %142 : vector<8x16xf32>
    %144 = vector.extract_strided_slice %7 {offsets = [1, 0, 2], sizes = [1, 8, 1], strides = [1, 1, 1]} : vector<3x8x4xf32> to vector<1x8x1xf32>
    %145 = vector.shape_cast %144 : vector<1x8x1xf32> to vector<8x1xf32>
    %146 = vector.extract_strided_slice %129 {offsets = [2, 0], sizes = [1, 16], strides = [1, 1]} : vector<4x16xf32> to vector<1x16xf32>
    %147 = vector.broadcast %145 : vector<8x1xf32> to vector<8x16xf32>
    %148 = vector.broadcast %146 : vector<1x16xf32> to vector<8x16xf32>
    %149 = arith.mulf %147, %148 : vector<8x16xf32>
    %150 = arith.addf %143, %149 : vector<8x16xf32>
    %151 = vector.extract_strided_slice %7 {offsets = [1, 0, 3], sizes = [1, 8, 1], strides = [1, 1, 1]} : vector<3x8x4xf32> to vector<1x8x1xf32>
    %152 = vector.shape_cast %151 : vector<1x8x1xf32> to vector<8x1xf32>
    %153 = vector.extract_strided_slice %129 {offsets = [3, 0], sizes = [1, 16], strides = [1, 1]} : vector<4x16xf32> to vector<1x16xf32>
    %154 = vector.broadcast %152 : vector<8x1xf32> to vector<8x16xf32>
    %155 = vector.broadcast %153 : vector<1x16xf32> to vector<8x16xf32>
    %156 = arith.mulf %154, %155 : vector<8x16xf32>
    %157 = arith.addf %150, %156 : vector<8x16xf32>
    %158 = vector.extract_strided_slice %6 {offsets = [4, 4], sizes = [4, 16], strides = [1, 1]} : vector<8x20xf32> to vector<4x16xf32>
    %159 = vector.extract_strided_slice %7 {offsets = [2, 0, 0], sizes = [1, 8, 1], strides = [1, 1, 1]} : vector<3x8x4xf32> to vector<1x8x1xf32>
    %160 = vector.shape_cast %159 : vector<1x8x1xf32> to vector<8x1xf32>
    %161 = vector.extract_strided_slice %158 {offsets = [0, 0], sizes = [1, 16], strides = [1, 1]} : vector<4x16xf32> to vector<1x16xf32>
    %162 = vector.broadcast %160 : vector<8x1xf32> to vector<8x16xf32>
    %163 = vector.broadcast %161 : vector<1x16xf32> to vector<8x16xf32>
    %164 = arith.mulf %162, %163 : vector<8x16xf32>
    %165 = arith.addf %157, %164 : vector<8x16xf32>
    %166 = vector.extract_strided_slice %7 {offsets = [2, 0, 1], sizes = [1, 8, 1], strides = [1, 1, 1]} : vector<3x8x4xf32> to vector<1x8x1xf32>
    %167 = vector.shape_cast %166 : vector<1x8x1xf32> to vector<8x1xf32>
    %168 = vector.extract_strided_slice %158 {offsets = [1, 0], sizes = [1, 16], strides = [1, 1]} : vector<4x16xf32> to vector<1x16xf32>
    %169 = vector.broadcast %167 : vector<8x1xf32> to vector<8x16xf32>
    %170 = vector.broadcast %168 : vector<1x16xf32> to vector<8x16xf32>
    %171 = arith.mulf %169, %170 : vector<8x16xf32>
    %172 = arith.addf %165, %171 : vector<8x16xf32>
    %173 = vector.extract_strided_slice %7 {offsets = [2, 0, 2], sizes = [1, 8, 1], strides = [1, 1, 1]} : vector<3x8x4xf32> to vector<1x8x1xf32>
    %174 = vector.shape_cast %173 : vector<1x8x1xf32> to vector<8x1xf32>
    %175 = vector.extract_strided_slice %158 {offsets = [2, 0], sizes = [1, 16], strides = [1, 1]} : vector<4x16xf32> to vector<1x16xf32>
    %176 = vector.broadcast %174 : vector<8x1xf32> to vector<8x16xf32>
    %177 = vector.broadcast %175 : vector<1x16xf32> to vector<8x16xf32>
    %178 = arith.mulf %176, %177 : vector<8x16xf32>
    %179 = arith.addf %172, %178 : vector<8x16xf32>
    %180 = vector.extract_strided_slice %7 {offsets = [2, 0, 3], sizes = [1, 8, 1], strides = [1, 1, 1]} : vector<3x8x4xf32> to vector<1x8x1xf32>
    %181 = vector.shape_cast %180 : vector<1x8x1xf32> to vector<8x1xf32>
    %182 = vector.extract_strided_slice %158 {offsets = [3, 0], sizes = [1, 16], strides = [1, 1]} : vector<4x16xf32> to vector<1x16xf32>
    %183 = vector.broadcast %181 : vector<8x1xf32> to vector<8x16xf32>
    %184 = vector.broadcast %182 : vector<1x16xf32> to vector<8x16xf32>
    %185 = arith.mulf %183, %184 : vector<8x16xf32>
    %186 = arith.addf %179, %185 : vector<8x16xf32>
    %187 = vector.broadcast %8 : vector<8x1xf32> to vector<8x16xf32>
    %188 = arith.addf %186, %187 : vector<8x16xf32>
    %189 = tpu.concatenate %98, %188 in 0 : vector<8x16xf32>, vector<8x16xf32> -> vector<16x16xf32>
    %c0_11 = arith.constant 0 : index
    %c0_12 = arith.constant 0 : index
    %c0_13 = arith.constant 0 : index
    %190 = vector.load %arg5[%c0_11, %c0_12, %c0_13] : memref<1x16x16xf32, #tpu.memory_space<vmem>>, vector<1x16x16xf32>
    %191 = vector.shape_cast %190 : vector<1x16x16xf32> to vector<16x16xf32>
    %192 = vector.shape_cast %189 : vector<16x16xf32> to vector<1x16x16xf32>
    tpu.vector_store %arg5[%c0_11, %c0_12, %c0_13], %192 {strides = array<i32>} : memref<1x16x16xf32, #tpu.memory_space<vmem>>, vector<1x16x16xf32>,
    %c1_i32 = arith.constant 1 : i32
    %193 = arith.addi %arg1, %c1_i32 : i32
    %c1_i32_14 = arith.constant 1 : i32
    %194 = arith.cmpi slt, %193, %c1_i32_14 : i32
    %195 = arith.extui %194 : i1 to i32
    %c0_i32_15 = arith.constant 0 : i32
    %196 = arith.cmpi ne, %195, %c0_i32_15 : i32
    scf.if %196 {
      %197 = vector.extract_strided_slice %6 {offsets = [0, 16], sizes = [8, 4], strides = [1, 1]} : vector<8x20xf32> to vector<8x4xf32>
      %c0_16 = arith.constant 0 : index
      %c0_17 = arith.constant 0 : index
      %198 = vector.load %arg6[%c0_16, %c0_17] : memref<8x4xf32, #tpu.memory_space<vmem>>, vector<8x4xf32>
      tpu.vector_store %arg6[%c0_16, %c0_17], %197 {strides = array<i32>} : memref<8x4xf32, #tpu.memory_space<vmem>>, vector<8x4xf32>,
    } else {
    }
    return
  }
  func.func @transform_0(%arg0: i32, %arg1: i32) -> (i32, i32, i32) {
    %c0_i32 = arith.constant 0 : i32
    %c0_i32_0 = arith.constant 0 : i32
    return %arg0, %c0_i32, %arg1 : i32, i32, i32
  }
  func.func @transform_1(%arg0: i32, %arg1: i32) -> (i32, i32, i32) {
    %c0_i32 = arith.constant 0 : i32
    %c0_i32_0 = arith.constant 0 : i32
    %c0_i32_1 = arith.constant 0 : i32
    %c0_i32_2 = arith.constant 0 : i32
    return %c0_i32, %c0_i32_0, %c0_i32_1 : i32, i32, i32
  }
  func.func @transform_2(%arg0: i32, %arg1: i32) -> (i32, i32) {
    %c0_i32 = arith.constant 0 : i32
    %c0_i32_0 = arith.constant 0 : i32
    %c0_i32_1 = arith.constant 0 : i32
    return %c0_i32, %c0_i32_0 : i32, i32
  }
  func.func @transform_3(%arg0: i32, %arg1: i32) -> (i32, i32, i32) {
    %c0_i32 = arith.constant 0 : i32
    %c0_i32_0 = arith.constant 0 : i32
    return %arg0, %c0_i32, %arg1 : i32, i32, i32
  }
}

</mosaic_0001>

<llo_original>
// kernel: tpu_custom_call.1
$region0: #{tpu_custom_call.1}
  #allocation0 [shape = 'u32[]', space=smem, size = 0x4, offset = 0x4, fixed_abs, tag = 'smem constant byte address 0x4 - core index']
  #allocation1 [shape = 'u32[72,128]{1,0:T(1,128)}', space=vmem, size = 0x9000, scoped, tag = 'internal scratch']
  #allocation2 [shape = 'f32[8,4]{1,0:T(8,128)}', space=vmem, size = 0x1000, scoped, tag = 'scratch operand']
  %s0 = inlined_call_operand.vmem [shape: f32[1,8,16], index: 0, kind: input, shape index: {}]
  %s1 = inlined_call_operand.vmem [shape: f32[3,8,4], index: 1, kind: input, shape index: {}]
  %s2 = inlined_call_operand.vmem [shape: f32[8,1], index: 2, kind: input, shape index: {}]
  %s3 = inlined_call_operand.hbm [shape: f32[1,16,16], index: 3, kind: output, shape index: {}]
  %s4 = sld [smem:[#allocation0]]
  $region30: #{tpu_custom_call.1} parent=0
    _
  %s6 = ssub.s32 1, %s4
  %s7 = scalar_select 0, %s6, %s4
  $region1: #{tpu_custom_call.1} parent=0
    #allocation3 [shape = 'u8[8192]{0}', space=vmem, size = 0x2000, scoped, tag = 'output window, operand 0, single buffered']
    #allocation4 [shape = 's32[1]{0}', space=sflag, size = 0x4, scoped, tag = 'scoped memory for tpu_custom_call.1']
    %8 = vsyncpa [#allocation4], 0
    // Predicated region
    $region2: #{tpu_custom_call.1} parent=1 // pred_check
      _
    $region3: #{tpu_custom_call.1} parent=1 // pred_check_branch
      %10 = sbr.rel (0) target = $region5
    $region4: #{tpu_custom_call.1} parent=1 // pred_region
      _
    $region5: #{tpu_custom_call.1} parent=1 // pred_fallthru
      _
    // Predicated region
    $region6: #{tpu_custom_call.1} parent=1 // pred_check
      _
    $region7: #{tpu_custom_call.1} parent=1 // pred_check_branch
      %12 = sbr.rel (0) target = $region9
    $region8: #{tpu_custom_call.1} parent=1 // pred_region
      _
    $region9: #{tpu_custom_call.1} parent=1 // pred_fallthru
      _
    // Predicated region
    $region10: #{tpu_custom_call.1} parent=1 // pred_check
      _
    $region11: #{tpu_custom_call.1} parent=1 // pred_check_branch
      %14 = sbr.rel (0) target = $region13
    $region12: #{tpu_custom_call.1} parent=1 // pred_region
      _
    $region13: #{tpu_custom_call.1} parent=1 // pred_fallthru
      _
    %v15 = vld [vmem:[%s0] sm:$0xff]
    %p16 = scmp.eq.s32.totalorder 0, 0
    // Predicated region
    $region14: #{tpu_custom_call.1} parent=1 // pred_check
      %p17 = pneg %p16
    $region15: #{tpu_custom_call.1} parent=1 // pred_check_branch
      %19 = sbr.rel (%p17) target = $region17
    $region16: #{tpu_custom_call.1} parent=1 // pred_region
      %vm20 = vcmask 31744
      %21 = vst.msk [vmem:[#allocation2] sm:$0xff] %vm20, 0.0
    $region17: #{tpu_custom_call.1} parent=1 // pred_fallthru
      _
    %v22 = vld [vmem:[#allocation2] sm:$0xff]
    %24 = vrot.lane.b32.xlu0 %v15, 4
    %v25 = vpop.permute.xlu0 %24
    %vm27 = vcmask 31744
    %v28 = vsel %vm27, %v22, %v25
    %v29 = vld [vmem:[%s1] sm:$0xff]
    %v30 = vld [vmem:[%s1 + $0x8] sm:$0xff]
    %v31 = vld [vmem:[%s1 + $0x10] sm:$0xff]
    %v32 = vld [vmem:[%s2] sm:$0xff]
    %34 = vset.pattern.permute.xlu0 0
    %35 = vperm.xlu0 %34, %v29
    %v36 = vpop.permute.xlu0 %35
    %v38 = vperm.slane %v28, 0
    %v39 = vmul.f32 %v36, %v38
    %v40 = vadd.f32 %v39, 0.0
    %41 = vset.pattern.permute.xlu0 1
    %42 = vperm.xlu0 %41, %v29
    %v43 = vpop.permute.xlu0 %42
    %v45 = vperm.slane %v28, 1
    %v46 = vmul.f32 %v43, %v45
    %v47 = vadd.f32 %v40, %v46
    %48 = vset.pattern.permute.xlu0 2
    %49 = vperm.xlu0 %48, %v29
    %v50 = vpop.permute.xlu0 %49
    %v52 = vperm.slane %v28, 2
    %v53 = vmul.f32 %v50, %v52
    %v54 = vadd.f32 %v47, %v53
    %55 = vset.pattern.permute.xlu0 3
    %56 = vperm.xlu0 %55, %v29
    %v57 = vpop.permute.xlu0 %56
    %v59 = vperm.slane %v28, 3
    %v60 = vmul.f32 %v57, %v59
    %v61 = vadd.f32 %v54, %v60
    %63 = vset.pattern.permute.xlu0 0
    %64 = vperm.xlu0 %63, %v30
    %v65 = vpop.permute.xlu0 %64
    %v67 = vmul.f32 %v65, %v38
    %69 = vrot.lane.b32.xlu0 %v67, 126
    %v70 = vpop.permute.xlu0 %69
    %v72 = vadd.f32 %v61, %v70
    %73 = vset.pattern.permute.xlu0 1
    %74 = vperm.xlu0 %73, %v30
    %v75 = vpop.permute.xlu0 %74
    %v77 = vmul.f32 %v75, %v45
    %79 = vrot.lane.b32.xlu0 %v77, 126
    %v80 = vpop.permute.xlu0 %79
    %v82 = vadd.f32 %v72, %v80
    %83 = vset.pattern.permute.xlu0 2
    %84 = vperm.xlu0 %83, %v30
    %v85 = vpop.permute.xlu0 %84
    %v87 = vmul.f32 %v85, %v52
    %89 = vrot.lane.b32.xlu0 %v87, 126
    %v90 = vpop.permute.xlu0 %89
    %v92 = vadd.f32 %v82, %v90
    %93 = vset.pattern.permute.xlu0 3
    %94 = vperm.xlu0 %93, %v30
    %v95 = vpop.permute.xlu0 %94
    %v97 = vmul.f32 %v95, %v59
    %99 = vrot.lane.b32.xlu0 %v97, 126
    %v100 = vpop.permute.xlu0 %99
    %v102 = vadd.f32 %v92, %v100
    %104 = vset.pattern.permute.xlu0 0
    %105 = vperm.xlu0 %104, %v31
    %v106 = vpop.permute.xlu0 %105
    %v108 = vmul.f32 %v106, %v38
    %110 = vrot.lane.b32.xlu0 %v108, 124
    %v111 = vpop.permute.xlu0 %110
    %v113 = vadd.f32 %v102, %v111
    %114 = vset.pattern.permute.xlu0 1
    %115 = vperm.xlu0 %114, %v31
    %v116 = vpop.permute.xlu0 %115
    %v118 = vmul.f32 %v116, %v45
    %120 = vrot.lane.b32.xlu0 %v118, 124
    %v121 = vpop.permute.xlu0 %120
    %v123 = vadd.f32 %v113, %v121
    %124 = vset.pattern.permute.xlu0 2
    %125 = vperm.xlu0 %124, %v31
    %v126 = vpop.permute.xlu0 %125
    %v128 = vmul.f32 %v126, %v52
    %130 = vrot.lane.b32.xlu0 %v128, 124
    %v131 = vpop.permute.xlu0 %130
    %v133 = vadd.f32 %v123, %v131
    %134 = vset.pattern.permute.xlu0 3
    %135 = vperm.xlu0 %134, %v31
    %v136 = vpop.permute.xlu0 %135
    %v138 = vmul.f32 %v136, %v59
    %140 = vrot.lane.b32.xlu0 %v138, 124
    %v141 = vpop.permute.xlu0 %140
    %v143 = vadd.f32 %v133, %v141
    %145 = vset.pattern.permute.xlu0 0
    %146 = vperm.xlu0 %145, %v32
    %v147 = vpop.permute.xlu0 %146
    %v149 = vadd.f32 %v143, %v147
    %v150 = vperm.slane %v28, 4
    %v151 = vmul.f32 %v36, %v150
    %v152 = vadd.f32 %v151, 0.0
    %v153 = vperm.slane %v28, 5
    %v154 = vmul.f32 %v43, %v153
    %v155 = vadd.f32 %v152, %v154
    %v156 = vperm.slane %v28, 6
    %v157 = vmul.f32 %v50, %v156
    %v158 = vadd.f32 %v155, %v157
    %v159 = vperm.slane %v28, 7
    %v160 = vmul.f32 %v57, %v159
    %v161 = vadd.f32 %v158, %v160
    %v162 = vmul.f32 %v65, %v150
    %164 = vrot.lane.b32.xlu0 %v162, 126
    %v165 = vpop.permute.xlu0 %164
    %v167 = vadd.f32 %v161, %v165
    %v168 = vmul.f32 %v75, %v153
    %170 = vrot.lane.b32.xlu0 %v168, 126
    %v171 = vpop.permute.xlu0 %170
    %v173 = vadd.f32 %v167, %v171
    %v174 = vmul.f32 %v85, %v156
    %176 = vrot.lane.b32.xlu0 %v174, 126
    %v177 = vpop.permute.xlu0 %176
    %v179 = vadd.f32 %v173, %v177
    %v180 = vmul.f32 %v95, %v159
    %182 = vrot.lane.b32.xlu0 %v180, 126
    %v183 = vpop.permute.xlu0 %182
    %v185 = vadd.f32 %v179, %v183
    %v186 = vmul.f32 %v106, %v150
    %188 = vrot.lane.b32.xlu0 %v186, 124
    %v189 = vpop.permute.xlu0 %188
    %v191 = vadd.f32 %v185, %v189
    %v192 = vmul.f32 %v116, %v153
    %194 = vrot.lane.b32.xlu0 %v192, 124
    %v195 = vpop.permute.xlu0 %194
    %v197 = vadd.f32 %v191, %v195
    %v198 = vmul.f32 %v126, %v156
    %200 = vrot.lane.b32.xlu0 %v198, 124
    %v201 = vpop.permute.xlu0 %200
    %v203 = vadd.f32 %v197, %v201
    %v204 = vmul.f32 %v136, %v159
    %206 = vrot.lane.b32.xlu0 %v204, 124
    %v207 = vpop.permute.xlu0 %206
    %v209 = vadd.f32 %v203, %v207
    %v210 = vadd.f32 %v209, %v147
    %vm211 = vcmask 130048
    %212 = vst.msk [vmem:[#allocation3] sm:$0xff] %vm211, %v149
    %213 = vst.msk [vmem:[#allocation3 + $0x8] sm:$0xff] %vm211, %v210
    %s214 = sadd.s32 0, 1
    %p215 = scmp.lt.s32.totalorder %s214, 1
    // Predicated region
    $region18: #{tpu_custom_call.1} parent=1 // pred_check
      %p216 = pneg %p215
    $region19: #{tpu_custom_call.1} parent=1 // pred_check_branch
      %218 = sbr.rel (%p216) target = $region21
    $region20: #{tpu_custom_call.1} parent=1 // pred_region
      %220 = vrot.lane.b32.xlu0 %v28, 112
      %v221 = vpop.permute.xlu0 %220
      %223 = vst.msk [vmem:[#allocation2] sm:$0xff] %vm27, %v221
    $region21: #{tpu_custom_call.1} parent=1 // pred_fallthru
      _
    // Predicated region
    $region22: #{tpu_custom_call.1} parent=1 // pred_check
      _
    $region23: #{tpu_custom_call.1} parent=1 // pred_check_branch
      %225 = sbr.rel (0) target = $region25
    $region24: #{tpu_custom_call.1} parent=1 // pred_region
      %227 = vsyncadd [#allocation4], 0
      %s228 = sshll.u32 [#allocation3], 4
      %s229 = int_to_ptr.vmem [resolvable:$true] %s228
      %s230 = sshll.u32 %s3, 4
      %s231 = int_to_ptr.hbm [resolvable:$true] %s230
      %236 = dma.vmem_to_hbm [thread:$0]  %s229, 256, %s231, [#allocation4], 128, 128, 8
    $region25: #{tpu_custom_call.1} parent=1 // pred_fallthru
      _
    // Predicated region
    $region26: #{tpu_custom_call.1} parent=1 // pred_check
      _
    $region27: #{tpu_custom_call.1} parent=1 // pred_check_branch
      %238 = sbr.rel (0) target = $region29
    $region28: #{tpu_custom_call.1} parent=1 // pred_region
      %240 = dma.done [#allocation4], 256
    $region29: #{tpu_custom_call.1} parent=1 // pred_fallthru
      _
    %241 = vsyncpa [#allocation4], 1

</llo_original>
